<compile_context>
chip_gen: v5e
topology: v5e:2x2
jax: 0.10.0
libtpu: 0.0.40
codegen_flags: <defaults>
</compile_context>

<pallas_src>
import jax
import jax.numpy as jnp
from jax.experimental import pallas as pl
from jax.experimental.pallas import tpu as pltpu


def _diffusion_kernel(w_ref, x0_ref, noise_ref, ca_ref, cb_ref, add_ref, out_ref):
    """Fused forward-diffusion + synthetic model (1x1 conv) + per-element MSE.

    Per grid step (one (batch-tile, HW-tile)):
      w_ref     : (C, C)        SMEM  1x1 conv weight (scalar reads)
      x0_ref    : (Bt, C, HWt)  VMEM
      noise_ref : (Bt, C, HWt)  VMEM
      ca_ref    : (Bt, 1, 1)    VMEM  sqrt_alphas_bar[t]        per batch row
      cb_ref    : (Bt, 1, 1)    VMEM  sqrt_1m_alphas_bar[t]     per batch row
      add_ref   : (Bt, C, 1)    VMEM  bias + time_emb[t] + label_emb[y] per row
      out_ref   : (Bt, C, HWt)  VMEM  elementwise squared error
    """
    x0 = x0_ref[...]
    nz = noise_ref[...]

    # Forward diffusion; (Bt,1,1) coefficients broadcast per batch row.
    x_t = ca_ref[...] * x0 + cb_ref[...] * nz

    # Synthetic model: 1x1 conv over channels as unrolled scalar*vector FMAs
    # on the VPU (C is tiny; this is free filler under the HBM DMAs).
    C = x_t.shape[1]
    rows = []
    for c in range(C):
        acc = w_ref[c, 0] * x_t[:, 0:1, :]
        for k in range(1, C):
            acc = acc + w_ref[c, k] * x_t[:, k:k + 1, :]
        rows.append(acc)
    pred = jnp.concatenate(rows, axis=1) + add_ref[...]

    # mse_loss(..., reduction='none') -- single full lane-dense store.
    diff = pred - nz
    out_ref[...] = diff * diff


def _pick_tiles(B, C, HW, target_bytes=2 << 20):
    """Pick (Bt, HWt): lane-dense blocks of roughly `target_bytes` per input."""
    bytes_per_lane = C * 4  # f32, full channel extent per block
    if HW % 128 == 0:
        # Largest multiple of 128 that divides HW and fits the budget.
        hwt = 128
        n128 = HW // 128
        for m in range(1, n128 + 1):
            if n128 % m == 0 and (128 * m) * bytes_per_lane <= target_bytes:
                hwt = 128 * m
    else:
        hwt = HW  # full extent (non-aligned full-dim block; correctness preserved)
    bt = 1
    for cand in range(B, 0, -1):
        if B % cand == 0 and cand * C * hwt * 4 <= target_bytes:
            bt = cand
            break
    return bt, hwt


def gaussian_diffusion_trainer_loss(x0, noise, coef_a, coef_b, w, add):
    """x0, noise: (B, C, HW) f32;  coef_a/coef_b: (B,) f32;
       w: (C, C) f32;  add: (B, C) f32.  Returns loss (B, C, HW) f32."""
    B, C, HW = x0.shape
    ca = coef_a.reshape(B, 1, 1).astype(jnp.float32)
    cb = coef_b.reshape(B, 1, 1).astype(jnp.float32)
    add3 = add.reshape(B, C, 1).astype(jnp.float32)
    w = w.astype(jnp.float32)

    bt, hwt = _pick_tiles(B, C, HW)
    grid = (B // bt, HW // hwt)  # batch tiles outer, HW tiles inner

    grid_spec = pltpu.PrefetchScalarGridSpec(
        num_scalar_prefetch=0,
        grid=grid,
        in_specs=[
            pl.BlockSpec(memory_space=pltpu.MemorySpace.SMEM),     # w (whole, SMEM)
            pl.BlockSpec((bt, C, hwt), lambda i, j: (i, 0, j)),    # x0
            pl.BlockSpec((bt, C, hwt), lambda i, j: (i, 0, j)),    # noise
            pl.BlockSpec((bt, 1, 1),   lambda i, j: (i, 0, 0)),    # sqrt_alphas_bar[t]
            pl.BlockSpec((bt, 1, 1),   lambda i, j: (i, 0, 0)),    # sqrt_1m_alphas_bar[t]
            pl.BlockSpec((bt, C, 1),   lambda i, j: (i, 0, 0)),    # additive cond
        ],
        out_specs=pl.BlockSpec((bt, C, hwt), lambda i, j: (i, 0, j)),
    )

    return pl.pallas_call(
        _diffusion_kernel,
        out_shape=jax.ShapeDtypeStruct((B, C, HW), jnp.float32),
        grid_spec=grid_spec,
        compiler_params=pltpu.CompilerParams(
            dimension_semantics=("parallel", "parallel"),
            vmem_limit_bytes=32 * 1024 * 1024,
        ),
    )(w, x0, noise, ca, cb, add3)


class GaussianDiffusionTrainer:
    """JAX/Pallas port of advfussion.free.DiffusionCondition.GaussianDiffusionTrainer."""

    def __init__(self, beta_1, beta_T, T, channels, num_classes, param_key):
        self.T = T
        betas = jnp.linspace(beta_1, beta_T, T, dtype=jnp.float32)
        alphas = 1.0 - betas
        alphas_bar = jnp.cumprod(alphas, axis=0)
        self.sqrt_alphas_bar = jnp.sqrt(alphas_bar)
        self.sqrt_one_minus_alphas_bar = jnp.sqrt(1.0 - alphas_bar)

        # Deterministic synthetic "model" parameters (1x1 conv + embeddings).
        kw, kb, kt, kl = jax.random.split(param_key, 4)
        self.w = jax.random.normal(kw, (channels, channels), jnp.float32) * 0.2
        self.bias = jax.random.normal(kb, (channels,), jnp.float32) * 0.1
        self.time_emb = jax.random.normal(kt, (T, channels), jnp.float32) * 0.1
        self.label_emb = jax.random.normal(kl, (num_classes, channels), jnp.float32) * 0.1

    def __call__(self, x_0, labels, key):
        # x_0: (B, C, H, W)  NCHW, matching PyTorch convention.
        B, C, H, W = x_0.shape
        k_t, k_n = jax.random.split(key)
        t = jax.random.randint(k_t, (B,), 0, self.T)
        noise = jax.random.normal(k_n, x_0.shape, x_0.dtype)

        # Glue (tiny gathers) in plain JAX — negligible vs. the bulk streams.
        coef_a = self.sqrt_alphas_bar[t]                 # extract(...)
        coef_b = self.sqrt_one_minus_alphas_bar[t]
        add = self.bias[None, :] + self.time_emb[t] + self.label_emb[labels]  # (B, C)

        x0_flat = x_0.reshape(B, C, H * W).astype(jnp.float32)
        noise_flat = noise.reshape(B, C, H * W).astype(jnp.float32)

        loss = gaussian_diffusion_trainer_loss(
            x0_flat, noise_flat, coef_a, coef_b, self.w, add)
        return loss.reshape(B, C, H, W), (t, noise, coef_a, coef_b, add)


def _reference_loss(x0, noise, coef_a, coef_b, w, add):
    """Pure-JAX reference of the same computation, for verification."""
    B, C, H, W = x0.shape
    x_t = coef_a[:, None, None, None] * x0 + coef_b[:, None, None, None] * noise
    x_t_f = x_t.reshape(B, C, H * W)
    pred = jnp.einsum("ck,bkp->bcp", w, x_t_f,
                      precision=jax.lax.Precision.HIGHEST) + add[:, :, None]
    diff = pred.reshape(B, C, H, W) - noise
    return diff * diff


if __name__ == "__main__":
    B, C, H, W = 2, 4, 16, 16
    T = 100
    num_classes = 10

    root = jax.random.PRNGKey(0)
    k_param, k_x, k_lbl, k_fwd = jax.random.split(root, 4)

    trainer = GaussianDiffusionTrainer(
        beta_1=1e-4, beta_T=0.02, T=T,
        channels=C, num_classes=num_classes, param_key=k_param)

    x_0 = jax.random.normal(k_x, (B, C, H, W), jnp.float32)
    labels = jax.random.randint(k_lbl, (B,), 0, num_classes)

    loss, (t, noise, coef_a, coef_b, add) = trainer(x_0, labels, k_fwd)
    loss = jax.block_until_ready(loss)

    ref = _reference_loss(x_0, noise, coef_a, coef_b, trainer.w, add)
    assert loss.shape == (B, C, H, W)
    assert jnp.allclose(loss, ref, atol=1e-4, rtol=1e-4), "mismatch vs reference"

    print("KERNEL_OK")
</pallas_src>

<mosaic_0001>
module attributes {stable_mosaic.version = 11 : i64} {
  func.func @_diffusion_kernel(%arg0: i32, %arg1: i32, %arg2: memref<4x4xf32, #tpu.memory_space<smem>>, %arg3: memref<2x4x256xf32, #tpu.memory_space<vmem>>, %arg4: memref<2x4x256xf32, #tpu.memory_space<vmem>>, %arg5: memref<2x1x1xf32, #tpu.memory_space<vmem>>, %arg6: memref<2x1x1xf32, #tpu.memory_space<vmem>>, %arg7: memref<2x4x1xf32, #tpu.memory_space<vmem>>, %arg8: memref<2x4x256xf32, #tpu.memory_space<vmem>>) attributes {dimension_semantics = [#tpu.dimension_semantics<parallel>, #tpu.dimension_semantics<parallel>], iteration_bounds = array<i64: 1, 1>, scalar_prefetch = 0 : i64, scratch_operands = 0 : i64, tpu.core_type = #tpu.core_type<tc>, window_params = [{transform_indices = @transform_0, window_bounds = array<i64: 4, 4>}, {transform_indices = @transform_1, window_bounds = array<i64: 2, 4, 256>}, {transform_indices = @transform_2, window_bounds = array<i64: 2, 4, 256>}, {transform_indices = @transform_3, window_bounds = array<i64: 2, 1, 1>}, {transform_indices = @transform_4, window_bounds = array<i64: 2, 1, 1>}, {transform_indices = @transform_5, window_bounds = array<i64: 2, 4, 1>}, {transform_indices = @transform_6, window_bounds = array<i64: 2, 4, 256>}]} {
    %c0 = arith.constant 0 : index
    %c0_0 = arith.constant 0 : index
    %c0_1 = arith.constant 0 : index
    %0 = vector.load %arg3[%c0, %c0_0, %c0_1] : memref<2x4x256xf32, #tpu.memory_space<vmem>>, vector<2x4x256xf32>
    %c0_2 = arith.constant 0 : index
    %c0_3 = arith.constant 0 : index
    %c0_4 = arith.constant 0 : index
    %1 = vector.load %arg4[%c0_2, %c0_3, %c0_4] : memref<2x4x256xf32, #tpu.memory_space<vmem>>, vector<2x4x256xf32>
    %c0_5 = arith.constant 0 : index
    %c0_6 = arith.constant 0 : index
    %c0_7 = arith.constant 0 : index
    %2 = vector.load %arg5[%c0_5, %c0_6, %c0_7] : memref<2x1x1xf32, #tpu.memory_space<vmem>>, vector<2x1x1xf32>
    %3 = vector.broadcast %2 : vector<2x1x1xf32> to vector<2x4x256xf32>
    %4 = arith.mulf %3, %0 : vector<2x4x256xf32>
    %c0_8 = arith.constant 0 : index
    %c0_9 = arith.constant 0 : index
    %c0_10 = arith.constant 0 : index
    %5 = vector.load %arg6[%c0_8, %c0_9, %c0_10] : memref<2x1x1xf32, #tpu.memory_space<vmem>>, vector<2x1x1xf32>
    %6 = vector.broadcast %5 : vector<2x1x1xf32> to vector<2x4x256xf32>
    %7 = arith.mulf %6, %1 : vector<2x4x256xf32>
    %8 = arith.addf %4, %7 : vector<2x4x256xf32>
    %c0_11 = arith.constant 0 : index
    %c0_12 = arith.constant 0 : index
    %9 = memref.load %arg2[%c0_11, %c0_12] : memref<4x4xf32, #tpu.memory_space<smem>>
    %10 = vector.extract_strided_slice %8 {offsets = [0, 0, 0], sizes = [2, 1, 256], strides = [1, 1, 1]} : vector<2x4x256xf32> to vector<2x1x256xf32>
    %11 = vector.broadcast %9 : f32 to vector<2x1x256xf32>
    %12 = arith.mulf %11, %10 : vector<2x1x256xf32>
    %c0_13 = arith.constant 0 : index
    %c1 = arith.constant 1 : index
    %13 = memref.load %arg2[%c0_13, %c1] : memref<4x4xf32, #tpu.memory_space<smem>>
    %14 = vector.extract_strided_slice %8 {offsets = [0, 1, 0], sizes = [2, 1, 256], strides = [1, 1, 1]} : vector<2x4x256xf32> to vector<2x1x256xf32>
    %15 = vector.broadcast %13 : f32 to vector<2x1x256xf32>
    %16 = arith.mulf %15, %14 : vector<2x1x256xf32>
    %17 = arith.addf %12, %16 : vector<2x1x256xf32>
    %c0_14 = arith.constant 0 : index
    %c2 = arith.constant 2 : index
    %18 = memref.load %arg2[%c0_14, %c2] : memref<4x4xf32, #tpu.memory_space<smem>>
    %19 = vector.extract_strided_slice %8 {offsets = [0, 2, 0], sizes = [2, 1, 256], strides = [1, 1, 1]} : vector<2x4x256xf32> to vector<2x1x256xf32>
    %20 = vector.broadcast %18 : f32 to vector<2x1x256xf32>
    %21 = arith.mulf %20, %19 : vector<2x1x256xf32>
    %22 = arith.addf %17, %21 : vector<2x1x256xf32>
    %c0_15 = arith.constant 0 : index
    %c3 = arith.constant 3 : index
    %23 = memref.load %arg2[%c0_15, %c3] : memref<4x4xf32, #tpu.memory_space<smem>>
    %24 = vector.extract_strided_slice %8 {offsets = [0, 3, 0], sizes = [2, 1, 256], strides = [1, 1, 1]} : vector<2x4x256xf32> to vector<2x1x256xf32>
    %25 = vector.broadcast %23 : f32 to vector<2x1x256xf32>
    %26 = arith.mulf %25, %24 : vector<2x1x256xf32>
    %27 = arith.addf %22, %26 : vector<2x1x256xf32>
    %c1_16 = arith.constant 1 : index
    %c0_17 = arith.constant 0 : index
    %28 = memref.load %arg2[%c1_16, %c0_17] : memref<4x4xf32, #tpu.memory_space<smem>>
    %29 = vector.extract_strided_slice %8 {offsets = [0, 0, 0], sizes = [2, 1, 256], strides = [1, 1, 1]} : vector<2x4x256xf32> to vector<2x1x256xf32>
    %30 = vector.broadcast %28 : f32 to vector<2x1x256xf32>
    %31 = arith.mulf %30, %29 : vector<2x1x256xf32>
    %c1_18 = arith.constant 1 : index
    %c1_19 = arith.constant 1 : index
    %32 = memref.load %arg2[%c1_18, %c1_19] : memref<4x4xf32, #tpu.memory_space<smem>>
    %33 = vector.extract_strided_slice %8 {offsets = [0, 1, 0], sizes = [2, 1, 256], strides = [1, 1, 1]} : vector<2x4x256xf32> to vector<2x1x256xf32>
    %34 = vector.broadcast %32 : f32 to vector<2x1x256xf32>
    %35 = arith.mulf %34, %33 : vector<2x1x256xf32>
    %36 = arith.addf %31, %35 : vector<2x1x256xf32>
    %c1_20 = arith.constant 1 : index
    %c2_21 = arith.constant 2 : index
    %37 = memref.load %arg2[%c1_20, %c2_21] : memref<4x4xf32, #tpu.memory_space<smem>>
    %38 = vector.extract_strided_slice %8 {offsets = [0, 2, 0], sizes = [2, 1, 256], strides = [1, 1, 1]} : vector<2x4x256xf32> to vector<2x1x256xf32>
    %39 = vector.broadcast %37 : f32 to vector<2x1x256xf32>
    %40 = arith.mulf %39, %38 : vector<2x1x256xf32>
    %41 = arith.addf %36, %40 : vector<2x1x256xf32>
    %c1_22 = arith.constant 1 : index
    %c3_23 = arith.constant 3 : index
    %42 = memref.load %arg2[%c1_22, %c3_23] : memref<4x4xf32, #tpu.memory_space<smem>>
    %43 = vector.extract_strided_slice %8 {offsets = [0, 3, 0], sizes = [2, 1, 256], strides = [1, 1, 1]} : vector<2x4x256xf32> to vector<2x1x256xf32>
    %44 = vector.broadcast %42 : f32 to vector<2x1x256xf32>
    %45 = arith.mulf %44, %43 : vector<2x1x256xf32>
    %46 = arith.addf %41, %45 : vector<2x1x256xf32>
    %c2_24 = arith.constant 2 : index
    %c0_25 = arith.constant 0 : index
    %47 = memref.load %arg2[%c2_24, %c0_25] : memref<4x4xf32, #tpu.memory_space<smem>>
    %48 = vector.extract_strided_slice %8 {offsets = [0, 0, 0], sizes = [2, 1, 256], strides = [1, 1, 1]} : vector<2x4x256xf32> to vector<2x1x256xf32>
    %49 = vector.broadcast %47 : f32 to vector<2x1x256xf32>
    %50 = arith.mulf %49, %48 : vector<2x1x256xf32>
    %c2_26 = arith.constant 2 : index
    %c1_27 = arith.constant 1 : index
    %51 = memref.load %arg2[%c2_26, %c1_27] : memref<4x4xf32, #tpu.memory_space<smem>>
    %52 = vector.extract_strided_slice %8 {offsets = [0, 1, 0], sizes = [2, 1, 256], strides = [1, 1, 1]} : vector<2x4x256xf32> to vector<2x1x256xf32>
    %53 = vector.broadcast %51 : f32 to vector<2x1x256xf32>
    %54 = arith.mulf %53, %52 : vector<2x1x256xf32>
    %55 = arith.addf %50, %54 : vector<2x1x256xf32>
    %c2_28 = arith.constant 2 : index
    %c2_29 = arith.constant 2 : index
    %56 = memref.load %arg2[%c2_28, %c2_29] : memref<4x4xf32, #tpu.memory_space<smem>>
    %57 = vector.extract_strided_slice %8 {offsets = [0, 2, 0], sizes = [2, 1, 256], strides = [1, 1, 1]} : vector<2x4x256xf32> to vector<2x1x256xf32>
    %58 = vector.broadcast %56 : f32 to vector<2x1x256xf32>
    %59 = arith.mulf %58, %57 : vector<2x1x256xf32>
    %60 = arith.addf %55, %59 : vector<2x1x256xf32>
    %c2_30 = arith.constant 2 : index
    %c3_31 = arith.constant 3 : index
    %61 = memref.load %arg2[%c2_30, %c3_31] : memref<4x4xf32, #tpu.memory_space<smem>>
    %62 = vector.extract_strided_slice %8 {offsets = [0, 3, 0], sizes = [2, 1, 256], strides = [1, 1, 1]} : vector<2x4x256xf32> to vector<2x1x256xf32>
    %63 = vector.broadcast %61 : f32 to vector<2x1x256xf32>
    %64 = arith.mulf %63, %62 : vector<2x1x256xf32>
    %65 = arith.addf %60, %64 : vector<2x1x256xf32>
    %c3_32 = arith.constant 3 : index
    %c0_33 = arith.constant 0 : index
    %66 = memref.load %arg2[%c3_32, %c0_33] : memref<4x4xf32, #tpu.memory_space<smem>>
    %67 = vector.extract_strided_slice %8 {offsets = [0, 0, 0], sizes = [2, 1, 256], strides = [1, 1, 1]} : vector<2x4x256xf32> to vector<2x1x256xf32>
    %68 = vector.broadcast %66 : f32 to vector<2x1x256xf32>
    %69 = arith.mulf %68, %67 : vector<2x1x256xf32>
    %c3_34 = arith.constant 3 : index
    %c1_35 = arith.constant 1 : index
    %70 = memref.load %arg2[%c3_34, %c1_35] : memref<4x4xf32, #tpu.memory_space<smem>>
    %71 = vector.extract_strided_slice %8 {offsets = [0, 1, 0], sizes = [2, 1, 256], strides = [1, 1, 1]} : vector<2x4x256xf32> to vector<2x1x256xf32>
    %72 = vector.broadcast %70 : f32 to vector<2x1x256xf32>
    %73 = arith.mulf %72, %71 : vector<2x1x256xf32>
    %74 = arith.addf %69, %73 : vector<2x1x256xf32>
    %c3_36 = arith.constant 3 : index
    %c2_37 = arith.constant 2 : index
    %75 = memref.load %arg2[%c3_36, %c2_37] : memref<4x4xf32, #tpu.memory_space<smem>>
    %76 = vector.extract_strided_slice %8 {offsets = [0, 2, 0], sizes = [2, 1, 256], strides = [1, 1, 1]} : vector<2x4x256xf32> to vector<2x1x256xf32>
    %77 = vector.broadcast %75 : f32 to vector<2x1x256xf32>
    %78 = arith.mulf %77, %76 : vector<2x1x256xf32>
    %79 = arith.addf %74, %78 : vector<2x1x256xf32>
    %c3_38 = arith.constant 3 : index
    %c3_39 = arith.constant 3 : index
    %80 = memref.load %arg2[%c3_38, %c3_39] : memref<4x4xf32, #tpu.memory_space<smem>>
    %81 = vector.extract_strided_slice %8 {offsets = [0, 3, 0], sizes = [2, 1, 256], strides = [1, 1, 1]} : vector<2x4x256xf32> to vector<2x1x256xf32>
    %82 = vector.broadcast %80 : f32 to vector<2x1x256xf32>
    %83 = arith.mulf %82, %81 : vector<2x1x256xf32>
    %84 = arith.addf %79, %83 : vector<2x1x256xf32>
    %85 = tpu.concatenate %27, %46, %65, %84 in 1 : vector<2x1x256xf32>, vector<2x1x256xf32>, vector<2x1x256xf32>, vector<2x1x256xf32> -> vector<2x4x256xf32>
    %c0_40 = arith.constant 0 : index
    %c0_41 = arith.constant 0 : index
    %c0_42 = arith.constant 0 : index
    %86 = vector.load %arg7[%c0_40, %c0_41, %c0_42] : memref<2x4x1xf32, #tpu.memory_space<vmem>>, vector<2x4x1xf32>
    %87 = vector.broadcast %86 : vector<2x4x1xf32> to vector<2x4x256xf32>
    %88 = arith.addf %85, %87 : vector<2x4x256xf32>
    %89 = arith.subf %88, %1 : vector<2x4x256xf32>
    %90 = arith.mulf %89, %89 : vector<2x4x256xf32>
    %c0_43 = arith.constant 0 : index
    %c0_44 = arith.constant 0 : index
    %c0_45 = arith.constant 0 : index
    %91 = vector.load %arg8[%c0_43, %c0_44, %c0_45] : memref<2x4x256xf32, #tpu.memory_space<vmem>>, vector<2x4x256xf32>
    tpu.vector_store %arg8[%c0_43, %c0_44, %c0_45], %90 {strides = array<i32>} : memref<2x4x256xf32, #tpu.memory_space<vmem>>, vector<2x4x256xf32>,
    return
  }
  func.func @transform_0(%arg0: i32, %arg1: i32) -> (i32, i32) {
    %c0_i32 = arith.constant 0 : i32
    %c0_i32_0 = arith.constant 0 : i32
    %c0_i32_1 = arith.constant 0 : i32
    return %c0_i32, %c0_i32_0 : i32, i32
  }
  func.func @transform_1(%arg0: i32, %arg1: i32) -> (i32, i32, i32) {
    %c0_i32 = arith.constant 0 : i32
    %c0_i32_0 = arith.constant 0 : i32
    return %arg0, %c0_i32, %arg1 : i32, i32, i32
  }
  func.func @transform_2(%arg0: i32, %arg1: i32) -> (i32, i32, i32) {
    %c0_i32 = arith.constant 0 : i32
    %c0_i32_0 = arith.constant 0 : i32
    return %arg0, %c0_i32, %arg1 : i32, i32, i32
  }
  func.func @transform_3(%arg0: i32, %arg1: i32) -> (i32, i32, i32) {
    %c0_i32 = arith.constant 0 : i32
    %c0_i32_0 = arith.constant 0 : i32
    %c0_i32_1 = arith.constant 0 : i32
    return %arg0, %c0_i32, %c0_i32_0 : i32, i32, i32
  }
  func.func @transform_4(%arg0: i32, %arg1: i32) -> (i32, i32, i32) {
    %c0_i32 = arith.constant 0 : i32
    %c0_i32_0 = arith.constant 0 : i32
    %c0_i32_1 = arith.constant 0 : i32
    return %arg0, %c0_i32, %c0_i32_0 : i32, i32, i32
  }
  func.func @transform_5(%arg0: i32, %arg1: i32) -> (i32, i32, i32) {
    %c0_i32 = arith.constant 0 : i32
    %c0_i32_0 = arith.constant 0 : i32
    %c0_i32_1 = arith.constant 0 : i32
    return %arg0, %c0_i32, %c0_i32_0 : i32, i32, i32
  }
  func.func @transform_6(%arg0: i32, %arg1: i32) -> (i32, i32, i32) {
    %c0_i32 = arith.constant 0 : i32
    %c0_i32_0 = arith.constant 0 : i32
    return %arg0, %c0_i32, %arg1 : i32, i32, i32
  }
}

</mosaic_0001>

<llo_original>
// kernel: tpu_custom_call.1
$region0: #{tpu_custom_call.1}
  #allocation0 [shape = 'u32[]', space=smem, size = 0x4, offset = 0x4, fixed_abs, tag = 'smem constant byte address 0x4 - core index']
  #allocation1 [shape = 'u32[72,128]{1,0:T(1,128)}', space=vmem, size = 0x9000, scoped, tag = 'internal scratch']
  %s0 = inlined_call_operand.vmem [shape: f32[4,4], index: 0, kind: input, shape index: {}]
  %s1 = inlined_call_operand.hbm [shape: f32[2,4,256], index: 1, kind: input, shape index: {}]
  %s2 = inlined_call_operand.hbm [shape: f32[2,4,256], index: 2, kind: input, shape index: {}]
  %s3 = inlined_call_operand.vmem [shape: f32[2,1,1], index: 3, kind: input, shape index: {}]
  %s4 = inlined_call_operand.vmem [shape: f32[2,1,1], index: 4, kind: input, shape index: {}]
  %s5 = inlined_call_operand.vmem [shape: f32[2,4,1], index: 5, kind: input, shape index: {}]
  %s6 = inlined_call_operand.hbm [shape: f32[2,4,256], index: 6, kind: output, shape index: {}]
  %s7 = sld [smem:[#allocation0]]
  $region46: #{tpu_custom_call.1} parent=0
    _
  %s9 = ssub.s32 1, %s7
  %s10 = scalar_select 0, %s9, %s7
  $region1: #{tpu_custom_call.1} parent=0
    #allocation2 [shape = 'u8[2048]{0}', space=smem, size = 0x800, scoped, tag = 'input window, operand 0, single buffered']
    #allocation3 [shape = 's32[1]{0}', space=sflag, size = 0x4, scoped, tag = 'scoped memory for tpu_custom_call.1']
    #allocation4 [shape = 's32[1]{0}', space=sflag, size = 0x4, scoped, tag = 'scoped memory for tpu_custom_call.1']
    #allocation5 [shape = 's32[1]{0}', space=sflag, size = 0x4, scoped, tag = 'scoped memory for tpu_custom_call.1']
    #allocation6 [shape = 'u8[8192]{0}', space=vmem, size = 0x2000, scoped, tag = 'input window, operand 1, single buffered']
    #allocation7 [shape = 'u8[8192]{0}', space=vmem, size = 0x2000, scoped, tag = 'input window, operand 2, single buffered']
    #allocation8 [shape = 's32[1]{0}', space=sflag, size = 0x4, scoped, tag = 'scoped memory for tpu_custom_call.1']
    #allocation9 [shape = 'u8[8192]{0}', space=vmem, size = 0x2000, scoped, tag = 'output window, operand 0, single buffered']
    %11 = vsyncpa [#allocation5], 0
    %12 = vsyncpa [#allocation3], 0
    %13 = vsyncpa [#allocation8], 0
    %14 = vsyncpa [#allocation4], 0
    // Predicated region
    $region2: #{tpu_custom_call.1} parent=1 // pred_check
      _
    $region3: #{tpu_custom_call.1} parent=1 // pred_check_branch
      %16 = sbr.rel (0) target = $region5
    $region4: #{tpu_custom_call.1} parent=1 // pred_region
      %18 = vsyncadd [#allocation5], 0
      %s20 = sshll.u32 %s0, 4
      %s21 = int_to_ptr.vmem [resolvable:$true] %s20
      %23 = dma.vmem_to_smem %s21, 64, [#allocation2], [#allocation5]
    $region5: #{tpu_custom_call.1} parent=1 // pred_fallthru
      _
    // Predicated region
    $region6: #{tpu_custom_call.1} parent=1 // pred_check
      _
    $region7: #{tpu_custom_call.1} parent=1 // pred_check_branch
      %25 = sbr.rel (0) target = $region9
    $region8: #{tpu_custom_call.1} parent=1 // pred_region
      %27 = vsyncadd [#allocation3], 0
      %s28 = sshll.u32 %s1, 4
      %s29 = int_to_ptr.hbm [resolvable:$true] %s28
      %s30 = sshll.u32 [#allocation6], 4
      %s31 = int_to_ptr.vmem [resolvable:$true] %s30
      %36 = dma.hbm_to_vmem [thread:$0]  %s29, 256, %s31, [#allocation3], 128, 128, 8
    $region9: #{tpu_custom_call.1} parent=1 // pred_fallthru
      _
    // Predicated region
    $region10: #{tpu_custom_call.1} parent=1 // pred_check
      _
    $region11: #{tpu_custom_call.1} parent=1 // pred_check_branch
      %38 = sbr.rel (0) target = $region13
    $region12: #{tpu_custom_call.1} parent=1 // pred_region
      %40 = vsyncadd [#allocation8], 0
      %s41 = sshll.u32 %s2, 4
      %s42 = int_to_ptr.hbm [resolvable:$true] %s41
      %s43 = sshll.u32 [#allocation7], 4
      %s44 = int_to_ptr.vmem [resolvable:$true] %s43
      %49 = dma.hbm_to_vmem [thread:$0]  %s42, 256, %s44, [#allocation8], 128, 128, 8
    $region13: #{tpu_custom_call.1} parent=1 // pred_fallthru
      _
    // Predicated region
    $region14: #{tpu_custom_call.1} parent=1 // pred_check
      _
    $region15: #{tpu_custom_call.1} parent=1 // pred_check_branch
      %51 = sbr.rel (0) target = $region17
    $region16: #{tpu_custom_call.1} parent=1 // pred_region
      _
    $region17: #{tpu_custom_call.1} parent=1 // pred_fallthru
      _
    // Predicated region
    $region18: #{tpu_custom_call.1} parent=1 // pred_check
      _
    $region19: #{tpu_custom_call.1} parent=1 // pred_check_branch
      %53 = sbr.rel (0) target = $region21
    $region20: #{tpu_custom_call.1} parent=1 // pred_region
      _
    $region21: #{tpu_custom_call.1} parent=1 // pred_fallthru
      _
    // Predicated region
    $region22: #{tpu_custom_call.1} parent=1 // pred_check
      _
    $region23: #{tpu_custom_call.1} parent=1 // pred_check_branch
      %55 = sbr.rel (0) target = $region25
    $region24: #{tpu_custom_call.1} parent=1 // pred_region
      _
    $region25: #{tpu_custom_call.1} parent=1 // pred_fallthru
      _
    // Predicated region
    $region26: #{tpu_custom_call.1} parent=1 // pred_check
      _
    $region27: #{tpu_custom_call.1} parent=1 // pred_check_branch
      %57 = sbr.rel (0) target = $region29
    $region28: #{tpu_custom_call.1} parent=1 // pred_region
      %59 = dma.done [#allocation5], 64
    $region29: #{tpu_custom_call.1} parent=1 // pred_fallthru
      _
    // Predicated region
    $region30: #{tpu_custom_call.1} parent=1 // pred_check
      _
    $region31: #{tpu_custom_call.1} parent=1 // pred_check_branch
      %61 = sbr.rel (0) target = $region33
    $region32: #{tpu_custom_call.1} parent=1 // pred_region
      %63 = dma.done [#allocation3], 256
    $region33: #{tpu_custom_call.1} parent=1 // pred_fallthru
      _
    // Predicated region
    $region34: #{tpu_custom_call.1} parent=1 // pred_check
      _
    $region35: #{tpu_custom_call.1} parent=1 // pred_check_branch
      %65 = sbr.rel (0) target = $region37
    $region36: #{tpu_custom_call.1} parent=1 // pred_region
      %67 = dma.done [#allocation8], 256
    $region37: #{tpu_custom_call.1} parent=1 // pred_fallthru
      _
    %68 = sfence
    %v69 = vld [vmem:[#allocation6] sm:$0xff]
    %v70 = vld [vmem:[#allocation6 + $0x8] sm:$0xff]
    %v71 = vld [vmem:[#allocation7] sm:$0xff]
    %v72 = vld [vmem:[#allocation7 + $0x8] sm:$0xff]
    %v73 = vld [vmem:[%s3] sm:$0x1]
    %v74 = vld [vmem:[%s3 + $0x1] sm:$0x1]
    %v77 = vperm.slane %v73, 0
    %v78 = vperm.slane %v74, 0
    %79 = vset.pattern.permute.xlu0 0
    %80 = vperm.xlu0 %79, %v77
    %v81 = vpop.permute.xlu0 %80
    %83 = vset.pattern.permute.xlu0 0
    %84 = vperm.xlu0 %83, %v78
    %v85 = vpop.permute.xlu0 %84
    %v87 = vmul.f32 %v81, %v69
    %v88 = vmul.f32 %v85, %v70
    %v89 = vld [vmem:[%s4] sm:$0x1]
    %v90 = vld [vmem:[%s4 + $0x1] sm:$0x1]
    %v93 = vperm.slane %v89, 0
    %v94 = vperm.slane %v90, 0
    %95 = vset.pattern.permute.xlu0 0
    %96 = vperm.xlu0 %95, %v93
    %v97 = vpop.permute.xlu0 %96
    %99 = vset.pattern.permute.xlu0 0
    %100 = vperm.xlu0 %99, %v94
    %v101 = vpop.permute.xlu0 %100
    %v103 = vmul.f32 %v97, %v71
    %v104 = vmul.f32 %v101, %v72
    %v105 = vadd.f32 %v87, %v103
    %v106 = vadd.f32 %v88, %v104
    %s107 = sld [smem:[#allocation2]]
    %v108 = vstv %s107
    %v109 = vmul.f32 %v108, %v105
    %v110 = vmul.f32 %v108, %v106
    %s111 = sld [smem:[#allocation2 + $0x1]]
    %v112 = vstv %s111
    %v113 = vmul.f32 %v112, %v105
    %v114 = vmul.f32 %v112, %v106
    %v117 = vrot.slane %v113, 5
    %v118 = vrot.slane %v117, 4
    %v119 = vrot.slane %v114, 5
    %v120 = vrot.slane %v119, 4
    %v123 = vadd.f32 %v109, %v118
    %v124 = vadd.f32 %v110, %v120
    %s125 = sld [smem:[#allocation2 + $0x2]]
    %v126 = vstv %s125
    %v127 = vmul.f32 %v126, %v105
    %v128 = vmul.f32 %v126, %v106
    %v131 = vrot.slane %v127, 6
    %v132 = vrot.slane %v131, 4
    %v133 = vrot.slane %v128, 6
    %v134 = vrot.slane %v133, 4
    %v137 = vadd.f32 %v123, %v132
    %v138 = vadd.f32 %v124, %v134
    %s139 = sld [smem:[#allocation2 + $0x3]]
    %v140 = vstv %s139
    %v141 = vmul.f32 %v140, %v105
    %v142 = vmul.f32 %v140, %v106
    %v145 = vrot.slane %v141, 7
    %v146 = vrot.slane %v145, 4
    %v147 = vrot.slane %v142, 7
    %v148 = vrot.slane %v147, 4
    %v151 = vadd.f32 %v137, %v146
    %v152 = vadd.f32 %v138, %v148
    %s153 = sld [smem:[#allocation2 + $0x80]]
    %v154 = vstv %s153
    %v155 = vmul.f32 %v154, %v105
    %v156 = vmul.f32 %v154, %v106
    %s157 = sld [smem:[#allocation2 + $0x81]]
    %v158 = vstv %s157
    %v159 = vmul.f32 %v158, %v105
    %v160 = vmul.f32 %v158, %v106
    %v163 = vrot.slane %v159, 5
    %v164 = vrot.slane %v163, 4
    %v165 = vrot.slane %v160, 5
    %v166 = vrot.slane %v165, 4
    %v169 = vadd.f32 %v155, %v164
    %v170 = vadd.f32 %v156, %v166
    %s171 = sld [smem:[#allocation2 + $0x82]]
    %v172 = vstv %s171
    %v173 = vmul.f32 %v172, %v105
    %v174 = vmul.f32 %v172, %v106
    %v177 = vrot.slane %v173, 6
    %v178 = vrot.slane %v177, 4
    %v179 = vrot.slane %v174, 6
    %v180 = vrot.slane %v179, 4
    %v183 = vadd.f32 %v169, %v178
    %v184 = vadd.f32 %v170, %v180
    %s185 = sld [smem:[#allocation2 + $0x83]]
    %v186 = vstv %s185
    %v187 = vmul.f32 %v186, %v105
    %v188 = vmul.f32 %v186, %v106
    %v191 = vrot.slane %v187, 7
    %v192 = vrot.slane %v191, 4
    %v193 = vrot.slane %v188, 7
    %v194 = vrot.slane %v193, 4
    %v197 = vadd.f32 %v183, %v192
    %v198 = vadd.f32 %v184, %v194
    %s199 = sld [smem:[#allocation2 + $0x100]]
    %v200 = vstv %s199
    %v201 = vmul.f32 %v200, %v105
    %v202 = vmul.f32 %v200, %v106
    %s203 = sld [smem:[#allocation2 + $0x101]]
    %v204 = vstv %s203
    %v205 = vmul.f32 %v204, %v105
    %v206 = vmul.f32 %v204, %v106
    %v209 = vrot.slane %v205, 5
    %v210 = vrot.slane %v209, 4
    %v211 = vrot.slane %v206, 5
    %v212 = vrot.slane %v211, 4
    %v215 = vadd.f32 %v201, %v210
    %v216 = vadd.f32 %v202, %v212
    %s217 = sld [smem:[#allocation2 + $0x102]]
    %v218 = vstv %s217
    %v219 = vmul.f32 %v218, %v105
    %v220 = vmul.f32 %v218, %v106
    %v223 = vrot.slane %v219, 6
    %v224 = vrot.slane %v223, 4
    %v225 = vrot.slane %v220, 6
    %v226 = vrot.slane %v225, 4
    %v229 = vadd.f32 %v215, %v224
    %v230 = vadd.f32 %v216, %v226
    %s231 = sld [smem:[#allocation2 + $0x103]]
    %v232 = vstv %s231
    %v233 = vmul.f32 %v232, %v105
    %v234 = vmul.f32 %v232, %v106
    %v237 = vrot.slane %v233, 7
    %v238 = vrot.slane %v237, 4
    %v239 = vrot.slane %v234, 7
    %v240 = vrot.slane %v239, 4
    %v243 = vadd.f32 %v229, %v238
    %v244 = vadd.f32 %v230, %v240
    %s245 = sld [smem:[#allocation2 + $0x180]]
    %v246 = vstv %s245
    %v247 = vmul.f32 %v246, %v105
    %v248 = vmul.f32 %v246, %v106
    %s249 = sld [smem:[#allocation2 + $0x181]]
    %v250 = vstv %s249
    %v251 = vmul.f32 %v250, %v105
    %v252 = vmul.f32 %v250, %v106
    %v255 = vrot.slane %v251, 5
    %v256 = vrot.slane %v255, 4
    %v257 = vrot.slane %v252, 5
    %v258 = vrot.slane %v257, 4
    %v261 = vadd.f32 %v247, %v256
    %v262 = vadd.f32 %v248, %v258
    %s263 = sld [smem:[#allocation2 + $0x182]]
    %v264 = vstv %s263
    %v265 = vmul.f32 %v264, %v105
    %v266 = vmul.f32 %v264, %v106
    %v269 = vrot.slane %v265, 6
    %v270 = vrot.slane %v269, 4
    %v271 = vrot.slane %v266, 6
    %v272 = vrot.slane %v271, 4
    %v275 = vadd.f32 %v261, %v270
    %v276 = vadd.f32 %v262, %v272
    %s277 = sld [smem:[#allocation2 + $0x183]]
    %v278 = vstv %s277
    %v279 = vmul.f32 %v278, %v105
    %v280 = vmul.f32 %v278, %v106
    %v283 = vrot.slane %v279, 7
    %v284 = vrot.slane %v283, 4
    %v285 = vrot.slane %v280, 7
    %v286 = vrot.slane %v285, 4
    %v289 = vadd.f32 %v275, %v284
    %v290 = vadd.f32 %v276, %v286
    %v293 = vperm.slane %v151, 0
    %v294 = vperm.slane %v151, 4
    %v295 = vperm.slane %v152, 0
    %v296 = vperm.slane %v152, 4
    %v303 = vperm.slane %v197, 0
    %v304 = vperm.slane %v197, 4
    %v305 = vperm.slane %v198, 0
    %v306 = vperm.slane %v198, 4
    %v313 = vperm.slane %v243, 0
    %v314 = vperm.slane %v243, 4
    %v315 = vperm.slane %v244, 0
    %v316 = vperm.slane %v244, 4
    %v323 = vperm.slane %v289, 0
    %v324 = vperm.slane %v289, 4
    %v325 = vperm.slane %v290, 0
    %v326 = vperm.slane %v290, 4
    %vm331 = vcmask 1040384
    %v332 = vsel %vm331, %v293, %v303
    %v333 = vsel %vm331, %v294, %v304
    %v334 = vsel %vm331, %v295, %v305
    %v335 = vsel %vm331, %v296, %v306
    %vm336 = vcmask 1041408
    %v337 = vsel %vm336, %v332, %v313
    %v338 = vsel %vm336, %v333, %v314
    %v339 = vsel %vm336, %v334, %v315
    %v340 = vsel %vm336, %v335, %v316
    %vm341 = vcmask 1042432
    %v342 = vsel %vm341, %v337, %v323
    %v343 = vsel %vm341, %v338, %v324
    %v344 = vsel %vm341, %v339, %v325
    %v345 = vsel %vm341, %v340, %v326
    %v346 = vld [vmem:[%s5] sm:$0xf]
    %v347 = vld [vmem:[%s5 + $0x4] sm:$0xf]
    %349 = vset.pattern.permute.xlu0 0
    %350 = vperm.xlu0 %349, %v346
    %v351 = vpop.permute.xlu0 %350
    %354 = vset.pattern.permute.xlu0 0
    %355 = vperm.xlu0 %354, %v347
    %v356 = vpop.permute.xlu0 %355
    %v358 = vadd.f32 %v342, %v351
    %v359 = vadd.f32 %v343, %v351
    %v360 = vadd.f32 %v344, %v356
    %v361 = vadd.f32 %v345, %v356
    %364 = vst [vmem:[#allocation1] ss:$2 sm:$0xff] %v71
    %v365 = vld.sshfl [vmem:[#allocation1] sm:$0xff pattern:$0x75316420]
    %v366 = vld.sshfl [vmem:[#allocation1 + $0x8] sm:$0xff pattern:$0x75316420]
    %s367 = scalar_lea.vmem [#allocation1], 16
    %368 = vst [vmem:[%s367] ss:$2 sm:$0xff] %v72
    %v369 = vld.sshfl [vmem:[#allocation1 + $0x10] sm:$0xff pattern:$0x75316420]
    %v370 = vld.sshfl [vmem:[#allocation1 + $0x18] sm:$0xff pattern:$0x75316420]
    %v375 = vsub.f32 %v358, %v365
    %v376 = vsub.f32 %v359, %v366
    %v377 = vsub.f32 %v360, %v369
    %v378 = vsub.f32 %v361, %v370
    %v379 = vmul.f32 %v375, %v375
    %v380 = vmul.f32 %v376, %v376
    %v381 = vmul.f32 %v377, %v377
    %v382 = vmul.f32 %v378, %v378
    %v387 = vrot.slane %v380, 4
    %v388 = vrot.slane %v382, 4
    %vm389 = vcmask 1043456
    %v390 = vsel %vm389, %v379, %v387
    %v391 = vsel %vm389, %v381, %v388
    %394 = vst [vmem:[#allocation9] sm:$0xff] %v390
    %395 = vst [vmem:[#allocation9 + $0x8] sm:$0xff] %v391
    // Predicated region
    $region38: #{tpu_custom_call.1} parent=1 // pred_check
      _
    $region39: #{tpu_custom_call.1} parent=1 // pred_check_branch
      %397 = sbr.rel (0) target = $region41
    $region40: #{tpu_custom_call.1} parent=1 // pred_region
      %399 = vsyncadd [#allocation4], 0
      %s400 = sshll.u32 [#allocation9], 4
      %s401 = int_to_ptr.vmem [resolvable:$true] %s400
      %s402 = sshll.u32 %s6, 4
      %s403 = int_to_ptr.hbm [resolvable:$true] %s402
      %408 = dma.vmem_to_hbm [thread:$0]  %s401, 256, %s403, [#allocation4], 128, 128, 8
    $region41: #{tpu_custom_call.1} parent=1 // pred_fallthru
      _
    // Predicated region
    $region42: #{tpu_custom_call.1} parent=1 // pred_check
      _
    $region43: #{tpu_custom_call.1} parent=1 // pred_check_branch
      %410 = sbr.rel (0) target = $region45
    $region44: #{tpu_custom_call.1} parent=1 // pred_region
      %412 = dma.done [#allocation4], 256
    $region45: #{tpu_custom_call.1} parent=1 // pred_fallthru
      _
    %413 = vsyncpa [#allocation3], 1
    %414 = vsyncpa [#allocation8], 1
    %415 = vsyncpa [#allocation4], 1
    %416 = vsyncpa [#allocation5], 1

</llo_original>
